<compile_context>
chip_gen: v7x
topology: tpu7x:2x2x1
jax: 0.10.0
libtpu: 0.0.40
codegen_flags: <defaults>
</compile_context>

<pallas_src>
import functools

import jax
import jax.numpy as jnp
import numpy as np
from jax.experimental import pallas as pl
from jax.experimental.pallas import tpu as pltpu


def _round_up(x: int, m: int) -> int:
    return (x + m - 1) // m * m


def _rel_pos_embedding_kernel(ids_ref, table_ref, out_ref, *, max_relative_position):
    # ids_ref:   (pack, tile_rows)   int32, lane-dense block
    # table_ref: (pack*P_pad, W)     f32, block-diagonal table, VMEM-resident
    # out_ref:   (tile_rows, W)      f32, lane-dense output tile
    pack, tile_rows = ids_ref.shape
    kdim = table_ref.shape[0]          # pack * P_pad
    p_pad = kdim // pack

    ids = ids_ref[...]                                   # (pack, tile_rows)
    # Upper clamp matches the module's torch.where(ids > max, max, ids).
    ids = jnp.minimum(ids, max_relative_position)
    # Lower clamp: negative ids would make nn.Embedding raise; without this they'd
    # silently produce an all-zero one-hot row.  No effect on valid inputs.
    ids = jnp.maximum(ids, 0)

    # Move ids into sublane orientation (tile_rows, pack): tiny XLU relayout.
    ids_cols = jnp.transpose(ids, (1, 0))
    # Offset packed sub-column j into block-diagonal slice j of the table.
    ids_off = ids_cols + p_pad * jax.lax.broadcasted_iota(
        jnp.int32, (tile_rows, pack), 1)

    # One-hot over the full contraction axis.  Per-j hit ranges are disjoint, so an
    # OR of `pack` broadcast compares builds it with no concatenate/relayout.
    lane = jax.lax.broadcasted_iota(jnp.int32, (tile_rows, kdim), 1)
    one_hot = ids_off[:, 0:1] == lane
    for j in range(1, pack):
        one_hot = jnp.logical_or(one_hot, ids_off[:, j:j + 1] == lane)

    # Gather as an MXU matmul; exact because the one-hot selects single f32 rows.
    out_ref[...] = jnp.dot(
        one_hot.astype(jnp.float32), table_ref[...],
        preferred_element_type=jnp.float32,
    ).astype(out_ref.dtype)


def make_sinusoidal_table(num_positions, embedding_dim, freq_base=5000,
                          pad_token_position=0):
    """Sinusoidal embedding table with the padding row zeroed (f32)."""
    pos = np.arange(num_positions, dtype=np.float64)[:, None]
    dim = np.arange(embedding_dim, dtype=np.float64)[None, :]
    angle_rates = 1.0 / np.power(
        float(freq_base), (2.0 * np.floor(dim / 2.0)) / float(embedding_dim))
    angles = pos * angle_rates
    table = np.zeros((num_positions, embedding_dim), dtype=np.float32)
    table[:, 0::2] = np.sin(angles[:, 0::2])
    table[:, 1::2] = np.cos(angles[:, 1::2])
    table[pad_token_position, :] = 0.0
    return jnp.asarray(table, dtype=jnp.float32)


def relative_position_embedding(relative_position_ids, table, max_relative_position,
                                *, max_tile_rows=512):
    """Pallas forward: table[min(ids, max_relative_position)]."""
    ids_shape = relative_position_ids.shape
    p, d = table.shape

    # ---- pack `pack` embeddings per 128-lane output row (d=32 -> pack=4) ----
    if d < 128 and 128 % d == 0:
        pack = 128 // d
    else:
        pack = 1                         # fallback: output last dim = d (full extent)
    w = pack * d                         # output lane width (128 when packing)
    p_pad = _round_up(p, 128 // pack)    # so pack * p_pad is a multiple of 128
    kdim = pack * p_pad

    # Block-diagonal table: replica j on rows [j*p_pad, j*p_pad+p), lanes [j*d,(j+1)*d).
    table_f32 = table.astype(jnp.float32)
    table_bd = jnp.zeros((kdim, w), jnp.float32)
    for j in range(pack):
        table_bd = table_bd.at[j * p_pad:j * p_pad + p, j * d:(j + 1) * d].set(table_f32)

    # ---- ids: flatten, pad, lay out lane-dense as (pack, rows_pad) ----
    ids_flat = relative_position_ids.reshape(-1).astype(jnp.int32)
    n = ids_flat.shape[0]
    rows = pl.cdiv(n, pack)              # packed output rows needed
    rows8 = _round_up(rows, 8)
    if rows8 <= 128:
        # Small problem: single full-extent block (block dims == array dims).
        tile_rows = rows8
    else:
        # Tiled: ids-block last dim must be a multiple of 128.
        tile_rows = min(_round_up(max_tile_rows, 128), _round_up(rows, 128))
        # v7x megacore: keep >= 2 grid steps (the "parallel" axis is what shards
        # work across both TensorCores); harmless on v5e/v6e.
        if pl.cdiv(rows, tile_rows) < 2:
            tile_rows = _round_up(pl.cdiv(rows, 2), 128)
    rows_pad = _round_up(rows, tile_rows)
    n_pad = rows_pad * pack
    # Padded ids are 0 -> the zeroed pad row; those rows are dropped below.
    ids_flat = jnp.pad(ids_flat, (0, n_pad - n))
    ids_lanes = ids_flat.reshape(rows_pad, pack).T       # (pack, rows_pad), lane-dense

    grid = (rows_pad // tile_rows,)
    cost = pl.CostEstimate(
        flops=2 * rows_pad * kdim * w,
        transcendentals=0,
        bytes_accessed=4 * pack * rows_pad + 4 * kdim * w + 4 * rows_pad * w,
    )

    out_rows = pl.pallas_call(
        functools.partial(_rel_pos_embedding_kernel,
                          max_relative_position=max_relative_position),
        out_shape=jax.ShapeDtypeStruct((rows_pad, w), jnp.float32),
        grid=grid,
        in_specs=[
            # ids: lane-dense (pack, tile_rows) block -> one small contiguous DMA.
            pl.BlockSpec((pack, tile_rows), lambda i: (0, i)),
            # table: full array, constant block index -> fetched once, VMEM-resident.
            pl.BlockSpec((kdim, w), lambda i: (0, 0)),
        ],
        # Lane-dense output tile (w = 128 when packed) -> unmasked vst, no D padding.
        out_specs=pl.BlockSpec((tile_rows, w), lambda i: (i, 0)),
        compiler_params=pltpu.CompilerParams(
            dimension_semantics=("parallel",)),
        cost_estimate=cost,
    )(ids_lanes, table_bd)

    # (rows_pad, pack*d) -> (rows_pad*pack, d) is a pure row-major reshape (no copy);
    # the [:n] prefix slice only costs anything when n needed row padding.
    out = out_rows.reshape(rows_pad * pack, d)[:n]
    return out.reshape(ids_shape + (d,))


if __name__ == "__main__":
    # Small, deterministic configuration consistent with the module.
    embedding_dim = 32
    max_relative_position = 16
    pad_token_position = 0
    freq_base = 5000
    num_positions = max_relative_position + 2          # 18 rows

    table = make_sinusoidal_table(num_positions, embedding_dim,
                                  freq_base=freq_base,
                                  pad_token_position=pad_token_position)

    # relative_position_ids: (batch=2, seq=8, seq=8); some ids exceed
    # max_relative_position so the clamp path is exercised, some hit the pad row.
    key = jax.random.PRNGKey(0)
    relative_position_ids = jax.random.randint(
        key, (2, 8, 8), minval=0, maxval=max_relative_position + 5, dtype=jnp.int32)

    out = relative_position_embedding(relative_position_ids, table,
                                      max_relative_position)
    out = jax.block_until_ready(out)

    # Reference: pure-JAX clamp + gather.
    clamped = jnp.minimum(relative_position_ids, max_relative_position)
    ref = jnp.take(table, clamped, axis=0)

    assert out.shape == relative_position_ids.shape + (embedding_dim,), out.shape
    np.testing.assert_allclose(np.asarray(out), np.asarray(ref), rtol=1e-6, atol=1e-6)

    print("KERNEL_OK")
</pallas_src>

<mosaic_0001>
module attributes {stable_mosaic.version = 11 : i64} {
  func.func @_rel_pos_embedding_kernel(%arg0: i32, %arg1: memref<4x32xi32, #tpu.memory_space<vmem>>, %arg2: memref<128x128xf32, #tpu.memory_space<vmem>>, %arg3: memref<32x128xf32, #tpu.memory_space<vmem>>) attributes {dimension_semantics = [#tpu.dimension_semantics<parallel>], iteration_bounds = array<i64: 1>, scalar_prefetch = 0 : i64, scratch_operands = 0 : i64, tpu.core_type = #tpu.core_type<tc>, window_params = [{transform_indices = @transform_0, window_bounds = array<i64: 4, 32>}, {pipeline_mode = #tpu.pipeline_mode<synchronous>, transform_indices = @transform_1, window_bounds = array<i64: 128, 128>}, {transform_indices = @transform_2, window_bounds = array<i64: 32, 128>}]} {
    %c0 = arith.constant 0 : index
    %c0_0 = arith.constant 0 : index
    %0 = vector.load %arg1[%c0, %c0_0] : memref<4x32xi32, #tpu.memory_space<vmem>>, vector<4x32xi32>
    %c16_i32 = arith.constant 16 : i32
    %1 = vector.broadcast %c16_i32 : i32 to vector<4x32xi32>
    %2 = arith.minsi %0, %1 : vector<4x32xi32>
    %c0_i32 = arith.constant 0 : i32
    %3 = vector.broadcast %c0_i32 : i32 to vector<4x32xi32>
    %4 = arith.maxsi %2, %3 : vector<4x32xi32>
    %5 = tpu.transpose %4, [1, 0] : vector<4x32xi32> -> vector<32x4xi32>
    %6 = tpu.iota {dimensions = array<i32: 1>} : vector<32x4xi32>
    %c32_i32 = arith.constant 32 : i32
    %7 = vector.broadcast %c32_i32 : i32 to vector<32x4xi32>
    %8 = arith.muli %7, %6 : vector<32x4xi32>
    %9 = arith.addi %5, %8 : vector<32x4xi32>
    %10 = tpu.iota {dimensions = array<i32: 1>} : vector<32x128xi32>
    %11 = vector.extract_strided_slice %9 {offsets = [0, 0], sizes = [32, 1], strides = [1, 1]} : vector<32x4xi32> to vector<32x1xi32>
    %12 = vector.broadcast %11 : vector<32x1xi32> to vector<32x128xi32>
    %13 = arith.cmpi eq, %12, %10 : vector<32x128xi32>
    %14 = vector.extract_strided_slice %9 {offsets = [0, 1], sizes = [32, 1], strides = [1, 1]} : vector<32x4xi32> to vector<32x1xi32>
    %15 = vector.broadcast %14 : vector<32x1xi32> to vector<32x128xi32>
    %16 = arith.cmpi eq, %15, %10 : vector<32x128xi32>
    %17 = arith.ori %13, %16 : vector<32x128xi1>
    %18 = vector.extract_strided_slice %9 {offsets = [0, 2], sizes = [32, 1], strides = [1, 1]} : vector<32x4xi32> to vector<32x1xi32>
    %19 = vector.broadcast %18 : vector<32x1xi32> to vector<32x128xi32>
    %20 = arith.cmpi eq, %19, %10 : vector<32x128xi32>
    %21 = arith.ori %17, %20 : vector<32x128xi1>
    %22 = vector.extract_strided_slice %9 {offsets = [0, 3], sizes = [32, 1], strides = [1, 1]} : vector<32x4xi32> to vector<32x1xi32>
    %23 = vector.broadcast %22 : vector<32x1xi32> to vector<32x128xi32>
    %24 = arith.cmpi eq, %23, %10 : vector<32x128xi32>
    %25 = arith.ori %21, %24 : vector<32x128xi1>
    %26 = arith.extui %25 : vector<32x128xi1> to vector<32x128xi32>
    %27 = arith.sitofp %26 : vector<32x128xi32> to vector<32x128xf32>
    %c0_1 = arith.constant 0 : index
    %c0_2 = arith.constant 0 : index
    %28 = vector.load %arg2[%c0_1, %c0_2] : memref<128x128xf32, #tpu.memory_space<vmem>>, vector<128x128xf32>
    %cst = arith.constant dense<0.000000e+00> : vector<32x128xf32>
    %29 = tpu.matmul %27, %28, %cst {dimension_numbers = #tpu.dot_dimension_numbers<[1], [0], [0], [1], [0, 0, 1, 1], [], []>} : vector<32x128xf32>, vector<128x128xf32>, vector<32x128xf32> -> vector<32x128xf32>
    %c0_3 = arith.constant 0 : index
    %c0_4 = arith.constant 0 : index
    %30 = vector.load %arg3[%c0_3, %c0_4] : memref<32x128xf32, #tpu.memory_space<vmem>>, vector<32x128xf32>
    tpu.vector_store %arg3[%c0_3, %c0_4], %29 {strides = array<i32>} : memref<32x128xf32, #tpu.memory_space<vmem>>, vector<32x128xf32>,
    return
  }
  func.func @transform_0(%arg0: i32) -> (i32, i32) {
    %c0_i32 = arith.constant 0 : i32
    %c0_i32_0 = arith.constant 0 : i32
    return %c0_i32, %arg0 : i32, i32
  }
  func.func @transform_1(%arg0: i32) -> (i32, i32) {
    %c0_i32 = arith.constant 0 : i32
    %c0_i32_0 = arith.constant 0 : i32
    %c0_i32_1 = arith.constant 0 : i32
    return %c0_i32, %c0_i32_0 : i32, i32
  }
  func.func @transform_2(%arg0: i32) -> (i32, i32) {
    %c0_i32 = arith.constant 0 : i32
    %c0_i32_0 = arith.constant 0 : i32
    return %arg0, %c0_i32 : i32, i32
  }
}

</mosaic_0001>

<llo_original>
// kernel: tpu_custom_call.1
$region0: #{tpu_custom_call.1}
  #allocation0 [shape = 'u32[]', space=smem, size = 0x4, offset = 0x4, fixed_abs, tag = 'smem constant byte address 0x4 - core index']
  #allocation1 [shape = 'u32[144,128]{1,0:T(1,128)}', space=vmem, size = 0x12000, scoped, tag = 'internal scratch']
  %s0 = inlined_call_operand.hbm [shape: s32[4,32], index: 0, kind: input, shape index: {}]
  %s1 = inlined_call_operand.hbm [shape: f32[128,128], index: 1, kind: input, shape index: {}]
  %s2 = inlined_call_operand.hbm [shape: f32[32,128], index: 2, kind: output, shape index: {}]
  %s3 = sld [smem:[#allocation0]]
  $region26: #{tpu_custom_call.1} parent=0
    _
  %s5 = ssub.s32 1, %s3
  %s6 = scalar_select 0, %s5, %s3
  $region1: #{tpu_custom_call.1} parent=0
    #allocation2 [shape = 'u8[2048]{0}', space=vmem, size = 0x800, scoped, tag = 'input window, operand 0, single buffered']
    #allocation3 [shape = 's32[1]{0}', space=sflag, size = 0x4, scoped, tag = 'scoped memory for tpu_custom_call.1']
    #allocation4 [shape = 's32[1]{0}', space=sflag, size = 0x4, scoped, tag = 'scoped memory for tpu_custom_call.1']
    #allocation5 [shape = 'u8[65536]{0}', space=vmem, size = 0x10000, scoped, tag = 'input window, operand 1, single buffered']
    #allocation6 [shape = 's32[1]{0}', space=sflag, size = 0x4, scoped, tag = 'scoped memory for tpu_custom_call.1']
    #allocation7 [shape = 'u8[16384]{0}', space=vmem, size = 0x4000, scoped, tag = 'output window, operand 0, single buffered']
    %7 = vsyncpa [#allocation3], 0
    %8 = vsyncpa [#allocation6], 0
    %9 = vsyncpa [#allocation4], 0
    // Predicated region
    $region2: #{tpu_custom_call.1} parent=1 // pred_check
      _
    $region3: #{tpu_custom_call.1} parent=1 // pred_check_branch
      %11 = sbr.rel (0) target = $region5
    $region4: #{tpu_custom_call.1} parent=1 // pred_region
      %s13 = ssub.s32 64, 64
      %14 = vsyncadd [#allocation3], %s13
      %s16 = sshll.u32 [#allocation2], 4
      %s17 = int_to_ptr.vmem [resolvable:$true] %s16
      %19 = dma.hbm_to_vmem [thread:$0]  %s0, 64, %s17, [#allocation3]
    $region5: #{tpu_custom_call.1} parent=1 // pred_fallthru
      _
    // Predicated region
    $region6: #{tpu_custom_call.1} parent=1 // pred_check
      _
    $region7: #{tpu_custom_call.1} parent=1 // pred_check_branch
      %21 = sbr.rel (0) target = $region9
    $region8: #{tpu_custom_call.1} parent=1 // pred_region
      %s23 = ssub.s32 2048, 2048
      %24 = vsyncadd [#allocation6], %s23
      %s25 = sshll.u32 [#allocation5], 4
      %s26 = int_to_ptr.vmem [resolvable:$true] %s25
      %31 = dma.hbm_to_vmem [thread:$0]  %s1, 2048, %s26, [#allocation6], 128, 128, 8
    $region9: #{tpu_custom_call.1} parent=1 // pred_fallthru
      _
    // Predicated region
    $region10: #{tpu_custom_call.1} parent=1 // pred_check
      _
    $region11: #{tpu_custom_call.1} parent=1 // pred_check_branch
      %33 = sbr.rel (0) target = $region13
    $region12: #{tpu_custom_call.1} parent=1 // pred_region
      %34 = dma.done [#allocation3], 64
    $region13: #{tpu_custom_call.1} parent=1 // pred_fallthru
      _
    // Predicated region
    $region14: #{tpu_custom_call.1} parent=1 // pred_check
      _
    $region15: #{tpu_custom_call.1} parent=1 // pred_check_branch
      %36 = sbr.rel (0) target = $region17
    $region16: #{tpu_custom_call.1} parent=1 // pred_region
      %37 = dma.done [#allocation6], 2048
    $region17: #{tpu_custom_call.1} parent=1 // pred_fallthru
      _
    %v38 = vld [vmem:[#allocation2] sm:$0xf]
    %vm39 = vcmp.lt.s32.totalorder %v38, 16
    %v40 = vsel %vm39, %v38, 16
    %vm41 = vcmp.gt.s32.totalorder %v40, 0
    %v42 = vsel %vm41, %v40, 0
    %43 = vxpose.xlu0.b32.start [1/16] %v42, 128
    %44 = vxpose.xlu0.b32.cont [2/16] 0, 128
    %45 = vxpose.xlu0.b32.cont [3/16] 0, 128
    %46 = vxpose.xlu0.b32.cont [4/16] 0, 128
    %47 = vxpose.xlu0.b32.cont [5/16] 0, 128
    %48 = vxpose.xlu0.b32.cont [6/16] 0, 128
    %49 = vxpose.xlu0.b32.cont [7/16] 0, 128
    %50 = vxpose.xlu0.b32.cont [8/16] 0, 128
    %51 = vxpose.xlu0.b32.cont [9/16] 0, 128
    %52 = vxpose.xlu0.b32.cont [10/16] 0, 128
    %53 = vxpose.xlu0.b32.cont [11/16] 0, 128
    %54 = vxpose.xlu0.b32.cont [12/16] 0, 128
    %55 = vxpose.xlu0.b32.cont [13/16] 0, 128
    %56 = vxpose.xlu0.b32.cont [14/16] 0, 128
    %57 = vxpose.xlu0.b32.cont [15/16] 0, 128
    %58 = vxpose.xlu0.b32.end [16/16] 0, 128
    %v59 = vpop.trf.xlu0
    %v60 = vpop.trf.xlu0
    %v61 = vpop.trf.xlu0
    %v62 = vpop.trf.xlu0
    %v63 = vpop.trf.xlu0
    %v64 = vpop.trf.xlu0
    %v65 = vpop.trf.xlu0
    %v66 = vpop.trf.xlu0
    %v67 = vpop.trf.xlu0
    %v68 = vpop.trf.xlu0
    %v69 = vpop.trf.xlu0
    %v70 = vpop.trf.xlu0
    %v71 = vpop.trf.xlu0
    %v72 = vpop.trf.xlu0
    %v73 = vpop.trf.xlu0
    %v74 = vpop.trf.xlu0
    %v75 = vlaneseq
    %v76 = vand.u32 %v75, 127
    %v77 = vmul.u32 %v76, 32
    %v78 = vadd.s32 %v59, %v77
    %v79 = vadd.s32 %v60, %v77
    %v80 = vadd.s32 %v61, %v77
    %v81 = vadd.s32 %v62, %v77
    %82 = vset.pattern.permute.xlu0 0
    %83 = vperm.xlu0 %82, %v78
    %v84 = vpop.permute.xlu0 %83
    %85 = vset.pattern.permute.xlu0 0
    %86 = vperm.xlu0 %85, %v79
    %v87 = vpop.permute.xlu0 %86
    %88 = vset.pattern.permute.xlu0 0
    %89 = vperm.xlu0 %88, %v80
    %v90 = vpop.permute.xlu0 %89
    %91 = vset.pattern.permute.xlu0 0
    %92 = vperm.xlu0 %91, %v81
    %v93 = vpop.permute.xlu0 %92
    %vm94 = vcmp.eq.s32.totalorder %v84, %v76
    %vm95 = vcmp.eq.s32.totalorder %v87, %v76
    %vm96 = vcmp.eq.s32.totalorder %v90, %v76
    %vm97 = vcmp.eq.s32.totalorder %v93, %v76
    %98 = vset.pattern.permute.xlu0 1
    %99 = vperm.xlu0 %98, %v78
    %v100 = vpop.permute.xlu0 %99
    %101 = vset.pattern.permute.xlu0 1
    %102 = vperm.xlu0 %101, %v79
    %v103 = vpop.permute.xlu0 %102
    %104 = vset.pattern.permute.xlu0 1
    %105 = vperm.xlu0 %104, %v80
    %v106 = vpop.permute.xlu0 %105
    %107 = vset.pattern.permute.xlu0 1
    %108 = vperm.xlu0 %107, %v81
    %v109 = vpop.permute.xlu0 %108
    %vm110 = vcmp.eq.s32.totalorder %v100, %v76
    %vm111 = vcmp.eq.s32.totalorder %v103, %v76
    %vm112 = vcmp.eq.s32.totalorder %v106, %v76
    %vm113 = vcmp.eq.s32.totalorder %v109, %v76
    %vm114 = vmor %vm94, %vm110
    %vm115 = vmor %vm95, %vm111
    %vm116 = vmor %vm96, %vm112
    %vm117 = vmor %vm97, %vm113
    %118 = vset.pattern.permute.xlu0 2
    %119 = vperm.xlu0 %118, %v78
    %v120 = vpop.permute.xlu0 %119
    %121 = vset.pattern.permute.xlu0 2
    %122 = vperm.xlu0 %121, %v79
    %v123 = vpop.permute.xlu0 %122
    %124 = vset.pattern.permute.xlu0 2
    %125 = vperm.xlu0 %124, %v80
    %v126 = vpop.permute.xlu0 %125
    %127 = vset.pattern.permute.xlu0 2
    %128 = vperm.xlu0 %127, %v81
    %v129 = vpop.permute.xlu0 %128
    %vm130 = vcmp.eq.s32.totalorder %v120, %v76
    %vm131 = vcmp.eq.s32.totalorder %v123, %v76
    %vm132 = vcmp.eq.s32.totalorder %v126, %v76
    %vm133 = vcmp.eq.s32.totalorder %v129, %v76
    %vm134 = vmor %vm114, %vm130
    %vm135 = vmor %vm115, %vm131
    %vm136 = vmor %vm116, %vm132
    %vm137 = vmor %vm117, %vm133
    %138 = vset.pattern.permute.xlu0 3
    %139 = vperm.xlu0 %138, %v78
    %v140 = vpop.permute.xlu0 %139
    %141 = vset.pattern.permute.xlu0 3
    %142 = vperm.xlu0 %141, %v79
    %v143 = vpop.permute.xlu0 %142
    %144 = vset.pattern.permute.xlu0 3
    %145 = vperm.xlu0 %144, %v80
    %v146 = vpop.permute.xlu0 %145
    %147 = vset.pattern.permute.xlu0 3
    %148 = vperm.xlu0 %147, %v81
    %v149 = vpop.permute.xlu0 %148
    %vm150 = vcmp.eq.s32.totalorder %v140, %v76
    %vm151 = vcmp.eq.s32.totalorder %v143, %v76
    %vm152 = vcmp.eq.s32.totalorder %v146, %v76
    %vm153 = vcmp.eq.s32.totalorder %v149, %v76
    %vm154 = vmor %vm134, %vm150
    %vm155 = vmor %vm135, %vm151
    %vm156 = vmor %vm136, %vm152
    %vm157 = vmor %vm137, %vm153
    %v158 = vsel %vm154, 1, 0
    %v159 = vsel %vm155, 1, 0
    %v160 = vsel %vm156, 1, 0
    %v161 = vsel %vm157, 1, 0
    %v162 = vcvt.s32.f32 %v158
    %v163 = vcvt.s32.f32 %v159
    %v164 = vcvt.s32.f32 %v160
    %v165 = vcvt.s32.f32 %v161
    %v166 = vld [vmem:[#allocation5] sm:$0xff]
    %v167 = vld [vmem:[#allocation5 + $0x8] sm:$0xff]
    %v168 = vld [vmem:[#allocation5 + $0x10] sm:$0xff]
    %v169 = vld [vmem:[#allocation5 + $0x18] sm:$0xff]
    %v170 = vld [vmem:[#allocation5 + $0x20] sm:$0xff]
    %v171 = vld [vmem:[#allocation5 + $0x28] sm:$0xff]
    %v172 = vld [vmem:[#allocation5 + $0x30] sm:$0xff]
    %v173 = vld [vmem:[#allocation5 + $0x38] sm:$0xff]
    %v174 = vld [vmem:[#allocation5 + $0x40] sm:$0xff]
    %v175 = vld [vmem:[#allocation5 + $0x48] sm:$0xff]
    %v176 = vld [vmem:[#allocation5 + $0x50] sm:$0xff]
    %v177 = vld [vmem:[#allocation5 + $0x58] sm:$0xff]
    %v178 = vld [vmem:[#allocation5 + $0x60] sm:$0xff]
    %v179 = vld [vmem:[#allocation5 + $0x68] sm:$0xff]
    %v180 = vld [vmem:[#allocation5 + $0x70] sm:$0xff]
    %v181 = vld [vmem:[#allocation5 + $0x78] sm:$0xff]
    %182 = vmatprep.subr.mxu0 0.0
    %183 = vmatpush1.msra.mxu0 %v166
    %184 = vmatprep.subr.mxu0 0.0
    %185 = vmatpush1.msra.mxu0 %v167
    %186 = vmatprep.subr.mxu0 0.0
    %187 = vmatpush1.msra.mxu0 %v168
    %188 = vmatprep.subr.mxu0 0.0
    %189 = vmatpush1.msra.mxu0 %v169
    %190 = vmatprep.subr.mxu0 0.0
    %191 = vmatpush1.msra.mxu0 %v170
    %192 = vmatprep.subr.mxu0 0.0
    %193 = vmatpush1.msra.mxu0 %v171
    %194 = vmatprep.subr.mxu0 0.0
    %195 = vmatpush1.msra.mxu0 %v172
    %196 = vmatprep.subr.mxu0 0.0
    %197 = vmatpush1.msra.mxu0 %v173
    %198 = vmatprep.subr.mxu0 0.0
    %199 = vmatpush1.msra.mxu0 %v174
    %200 = vmatprep.subr.mxu0 0.0
    %201 = vmatpush1.msra.mxu0 %v175
    %202 = vmatprep.subr.mxu0 0.0
    %203 = vmatpush1.msra.mxu0 %v176
    %204 = vmatprep.subr.mxu0 0.0
    %205 = vmatpush1.msra.mxu0 %v177
    %206 = vmatprep.subr.mxu0 0.0
    %207 = vmatpush1.msra.mxu0 %v178
    %208 = vmatprep.subr.mxu0 0.0
    %209 = vmatpush1.msra.mxu0 %v179
    %210 = vmatprep.subr.mxu0 0.0
    %211 = vmatpush1.msra.mxu0 %v180
    %212 = vmatprep.subr.mxu0 0.0
    %213 = vmatpush1.msra.mxu0 %v181
    %214 = vmatprep.subr.mxu0 0.0
    %215 = vmatpush1.msra.mxu0 0.0
    %216 = vmatprep.subr.mxu0 0.0
    %217 = vmatpush1.msra.mxu0 0.0
    %218 = vmatprep.subr.mxu0 0.0
    %219 = vmatpush1.msra.mxu0 0.0
    %220 = vmatprep.subr.mxu0 0.0
    %221 = vmatpush1.msra.mxu0 0.0
    %222 = vmatprep.subr.mxu0 0.0
    %223 = vmatpush1.msra.mxu0 0.0
    %224 = vmatprep.subr.mxu0 0.0
    %225 = vmatpush1.msra.mxu0 0.0
    %226 = vmatprep.subr.mxu0 0.0
    %227 = vmatpush1.msra.mxu0 0.0
    %228 = vmatprep.subr.mxu0 0.0
    %229 = vmatpush1.msra.mxu0 0.0
    %230 = vmatprep.subr.mxu0 0.0
    %231 = vmatpush1.msra.mxu0 0.0
    %232 = vmatprep.subr.mxu0 0.0
    %233 = vmatpush1.msra.mxu0 0.0
    %234 = vmatprep.subr.mxu0 0.0
    %235 = vmatpush1.msra.mxu0 0.0
    %236 = vmatprep.subr.mxu0 0.0
    %237 = vmatpush1.msra.mxu0 0.0
    %238 = vmatprep.subr.mxu0 0.0
    %239 = vmatpush1.msra.mxu0 0.0
    %240 = vmatprep.subr.mxu0 0.0
    %241 = vmatpush1.msra.mxu0 0.0
    %242 = vmatprep.subr.mxu0 0.0
    %243 = vmatpush1.msra.mxu0 0.0
    %244 = vmatprep.subr.mxu0 0.0
    %245 = vmatpush1.msra.mxu0 0.0
    %246 = vmatprep.mubr.f32.mxu0 0.0
    %247 = vmatmul.mubr.f32.gmra.mrb[0].mxu0 %v162
    %v248 = vpop.f32.mrb[0].mxu0
    %v249 = vadd.f32 0.0, %v248
    %v250 = vpop.f32.mrb[0].mxu0
    %251 = vmatprep.mubr.f32.mxu0 0.0
    %252 = vmatmul.mubr.f32.gmra.mrb[0].mxu0 %v163
    %v253 = vpop.f32.mrb[0].mxu0
    %v254 = vadd.f32 0.0, %v253
    %v255 = vpop.f32.mrb[0].mxu0
    %256 = vmatprep.mubr.f32.mxu0 0.0
    %257 = vmatmul.mubr.f32.gmra.mrb[0].mxu0 %v164
    %v258 = vpop.f32.mrb[0].mxu0
    %v259 = vadd.f32 0.0, %v258
    %v260 = vpop.f32.mrb[0].mxu0
    %261 = vmatprep.mubr.f32.mxu0 0.0
    %262 = vmatmul.mubr.f32.gmra.mrb[0].mxu0 %v165
    %v263 = vpop.f32.mrb[0].mxu0
    %v264 = vadd.f32 0.0, %v263
    %v265 = vpop.f32.mrb[0].mxu0
    %266 = vdwg.mxu0
    %267 = vst [vmem:[#allocation7] sm:$0xff] %v249
    %268 = vst [vmem:[#allocation7 + $0x8] sm:$0xff] %v254
    %269 = vst [vmem:[#allocation7 + $0x10] sm:$0xff] %v259
    %270 = vst [vmem:[#allocation7 + $0x18] sm:$0xff] %v264
    // Predicated region
    $region18: #{tpu_custom_call.1} parent=1 // pred_check
      _
    $region19: #{tpu_custom_call.1} parent=1 // pred_check_branch
      %272 = sbr.rel (0) target = $region21
    $region20: #{tpu_custom_call.1} parent=1 // pred_region
      %s274 = ssub.s32 512, 512
      %275 = vsyncadd [#allocation4], %s274
      %s276 = sshll.u32 [#allocation7], 4
      %s277 = int_to_ptr.vmem [resolvable:$true] %s276
      %282 = dma.vmem_to_hbm [thread:$0]  %s277, 512, %s2, [#allocation4], 128, 128, 8
    $region21: #{tpu_custom_call.1} parent=1 // pred_fallthru
      _
    // Predicated region
    $region22: #{tpu_custom_call.1} parent=1 // pred_check
      _
    $region23: #{tpu_custom_call.1} parent=1 // pred_check_branch
      %284 = sbr.rel (0) target = $region25
    $region24: #{tpu_custom_call.1} parent=1 // pred_region
      %285 = dma.done [#allocation4], 512
    $region25: #{tpu_custom_call.1} parent=1 // pred_fallthru
      _
    %286 = vsyncpa [#allocation3], 1
    %287 = vsyncpa [#allocation6], 1
    %288 = vsyncpa [#allocation4], 1

</llo_original>
